<compile_context>
chip_gen: v7x
topology: tpu7x:2x2x1
jax: 0.10.0
libtpu: 0.0.40
codegen_flags: <defaults>
</compile_context>

<pallas_src>
import functools

import jax
import jax.numpy as jnp
from jax.experimental import pallas as pl
from jax.experimental.pallas import tpu as pltpu


def mlp_kernel(x_ref, w1_ref, b1_ref, w2_ref, b2_ref, w3_ref, b3_ref, o_ref,
               *, act_dtype):
    """Fused 3-layer MLP.

    MXU operands stay in the parameter dtype (bf16 -> full MXU rate on
    v6e/v7x).  Accumulation and the bias add are f32 (exact), then the tanh
    runs in `act_dtype`: bf16 on v6e/v7x (2x EUP throughput, range-friendly
    for tanh), f32 on v5e (no bf16 VPU/EUP there).
    """
    h = jnp.dot(x_ref[...], w1_ref[...], preferred_element_type=jnp.float32)
    h = jnp.tanh((h + b1_ref[...].astype(jnp.float32)).astype(act_dtype))

    h = jnp.dot(h.astype(w2_ref.dtype), w2_ref[...],
                preferred_element_type=jnp.float32)
    h = jnp.tanh((h + b2_ref[...].astype(jnp.float32)).astype(act_dtype))

    y = jnp.dot(h.astype(w3_ref.dtype), w3_ref[...],
                preferred_element_type=jnp.float32)
    y = jnp.tanh((y + b3_ref[...].astype(jnp.float32)).astype(act_dtype))

    o_ref[...] = y.astype(o_ref.dtype)


def _round_up(x, m):
    return ((x + m - 1) // m) * m


def _tpu_kind():
    try:
        return jax.devices()[0].device_kind.lower()
    except Exception:
        return ""


_MAX_BATCH_TILE = 2048  # big tiles amortize the ~0.35us/step pipeline overhead


def mlp_forward(x, params, *, batch_tile=None):
    """x: (B, input_nodes). params: dict w1,b1,w2,b2,w3,b3 with w as (in, out)."""
    B, d_in = x.shape
    d_h = params["w1"].shape[1]
    d_out = params["w3"].shape[1]
    dtype = x.dtype
    item = jnp.dtype(dtype).itemsize

    kind = _tpu_kind()
    is_v5e = ("v5 lite" in kind) or ("v5e" in kind) or ("v5litepod" in kind)
    two_cores = "v7" in kind  # v7x: 2 TensorCores per chip

    # tanh dtype: bf16 on v6e/v7x when the data is bf16, f32 otherwise / on v5e.
    if dtype == jnp.bfloat16 and not is_v5e:
        act_dtype = jnp.bfloat16
    else:
        act_dtype = jnp.float32

    # --- batch tiling ------------------------------------------------------
    # * tiny B            -> single grid step (block == full batch extent).
    # * v7x and B > 64    -> at least 2 steps so both TCs get work.
    # * large B           -> enough steps that each tile <= _MAX_BATCH_TILE.
    # Tile is sized ~cdiv(B, steps) (rounded to the 8-row sublane) so padding
    # stays < 8*steps rows instead of up to a whole tile.
    if batch_tile is None:
        min_steps = 2 if (two_cores and B > 64) else 1
        num_steps = max(min_steps, pl.cdiv(B, _MAX_BATCH_TILE))
        if num_steps == 1:
            batch_tile = B
        else:
            batch_tile = _round_up(pl.cdiv(B, num_steps), 8)
    else:
        batch_tile = min(batch_tile, B)
        if batch_tile < B:
            batch_tile = _round_up(batch_tile, 8)
    num_steps = pl.cdiv(B, batch_tile)
    B_pad = num_steps * batch_tile
    x_p = x if B_pad == B else jnp.pad(x, ((0, B_pad - B), (0, 0)))

    grid = (num_steps,)

    # Weights/biases are small (d_h=128 -> ~150 KB total): every grid step
    # gets the full, constant-index block (no re-DMA between steps).
    in_specs = [
        pl.BlockSpec((batch_tile, d_in), lambda i: (i, 0)),   # x tile
        pl.BlockSpec((d_in, d_h), lambda i: (0, 0)),          # w1
        pl.BlockSpec((1, d_h), lambda i: (0, 0)),             # b1
        pl.BlockSpec((d_h, d_h), lambda i: (0, 0)),           # w2
        pl.BlockSpec((1, d_h), lambda i: (0, 0)),             # b2
        pl.BlockSpec((d_h, d_out), lambda i: (0, 0)),         # w3
        pl.BlockSpec((1, d_out), lambda i: (0, 0)),           # b3
    ]
    # Unpadded output block: last dim (= d_out) equals the full array extent,
    # so this is legal, and HBM writeback is d_out columns, not 128.
    out_specs = pl.BlockSpec((batch_tile, d_out), lambda i: (i, 0))

    flops = 2 * B_pad * (d_in * d_h + d_h * d_h + d_h * d_out)
    transcendentals = B_pad * (2 * d_h + d_out)
    bytes_accessed = item * (
        B_pad * d_in                                 # x
        + d_in * d_h + d_h * d_h + d_h * d_out       # weights
        + 2 * d_h + d_out                            # biases
        + B_pad * d_out                              # output
    )

    # Explicit scoped-VMEM budget: double-buffered x/out tiles + (double
    # buffered) weights + f32 intermediates, with 2x headroom, clamped to a
    # range that is safe on every chip (v5e default is only 16 MiB).
    vmem_need = (
        item * (2 * batch_tile * d_in + 2 * batch_tile * d_out)
        + 2 * item * (d_in * d_h + d_h * d_h + d_h * d_out + 2 * d_h + d_out)
        + 4 * batch_tile * d_h * 2
    )
    vmem_limit = int(min(max(2 * vmem_need, 32 << 20), 48 << 20))

    out = pl.pallas_call(
        functools.partial(mlp_kernel, act_dtype=act_dtype),
        out_shape=jax.ShapeDtypeStruct((B_pad, d_out), dtype),
        grid_spec=pltpu.PrefetchScalarGridSpec(
            num_scalar_prefetch=0,
            grid=grid,
            in_specs=in_specs,
            out_specs=out_specs,
        ),
        compiler_params=pltpu.CompilerParams(
            dimension_semantics=("parallel",),
            vmem_limit_bytes=vmem_limit,
        ),
        cost_estimate=pl.CostEstimate(
            flops=flops,
            transcendentals=transcendentals,
            bytes_accessed=bytes_accessed,
        ),
    )(x_p,
      params["w1"], params["b1"],
      params["w2"], params["b2"],
      params["w3"], params["b3"])

    return out[:B, :]


def init_params(key, input_nodes, output_nodes, hidden_units=128,
                dtype=jnp.float32):
    """Deterministic init mimicking nn.Linear shapes; weights stored (in, out)."""
    ks = jax.random.split(key, 6)

    def lin(kw, kb, fan_in, fan_out):
        bound = 1.0 / jnp.sqrt(fan_in)
        w = jax.random.uniform(kw, (fan_in, fan_out), dtype, -bound, bound)
        b = jax.random.uniform(kb, (1, fan_out), dtype, -bound, bound)
        return w, b

    w1, b1 = lin(ks[0], ks[1], input_nodes, hidden_units)
    w2, b2 = lin(ks[2], ks[3], hidden_units, hidden_units)
    w3, b3 = lin(ks[4], ks[5], hidden_units, output_nodes)
    return dict(w1=w1, b1=b1, w2=w2, b2=b2, w3=w3, b3=b3)


def mlp_reference(x, p):
    h = jnp.tanh(x @ p["w1"] + p["b1"])
    h = jnp.tanh(h @ p["w2"] + p["b2"])
    return jnp.tanh(h @ p["w3"] + p["b3"])


if __name__ == "__main__":
    key = jax.random.PRNGKey(0)
    k_x, k_p, k_x2 = jax.random.split(key, 3)

    batch = 16
    input_nodes = 32
    hidden_units = 128
    output_nodes = 8

    x = jax.random.normal(k_x, (batch, input_nodes), jnp.float32)
    params = init_params(k_p, input_nodes, output_nodes, hidden_units)
    ref = mlp_reference(x, params)

    # f32 run (single-step path): exact check against the pure-JAX reference.
    out = jax.block_until_ready(mlp_forward(x, params))
    assert out.shape == (batch, output_nodes)
    assert jnp.allclose(out, ref, atol=1e-5, rtol=1e-5), "f32 mismatch vs reference"

    # bf16 run: bf16 MXU operands + (on v6e/v7x) bf16 tanh, f32 accumulate.
    x_bf = x.astype(jnp.bfloat16)
    params_bf = {k: v.astype(jnp.bfloat16) for k, v in params.items()}
    out_bf = jax.block_until_ready(mlp_forward(x_bf, params_bf))
    assert out_bf.shape == (batch, output_nodes)
    assert jnp.allclose(out_bf.astype(jnp.float32), ref, atol=1e-1), \
        "bf16 mismatch vs reference"

    # multi-step tiled path (explicit batch_tile) with ragged B -> exercises
    # batch padding, the per-step x/out DMAs and the unpadded output block.
    B2 = 200
    x2 = jax.random.normal(k_x2, (B2, input_nodes), jnp.float32)
    ref2 = mlp_reference(x2, params)
    out2 = jax.block_until_ready(mlp_forward(x2, params, batch_tile=64))
    assert out2.shape == (B2, output_nodes)
    assert jnp.allclose(out2, ref2, atol=1e-5, rtol=1e-5), \
        "tiled f32 mismatch vs reference"

    print("KERNEL_OK")
</pallas_src>

<mosaic_0001>
module attributes {stable_mosaic.version = 11 : i64} {
  func.func @mlp_kernel(%arg0: i32, %arg1: memref<16x32xf32, #tpu.memory_space<vmem>>, %arg2: memref<32x128xf32, #tpu.memory_space<vmem>>, %arg3: memref<1x128xf32, #tpu.memory_space<vmem>>, %arg4: memref<128x128xf32, #tpu.memory_space<vmem>>, %arg5: memref<1x128xf32, #tpu.memory_space<vmem>>, %arg6: memref<128x8xf32, #tpu.memory_space<vmem>>, %arg7: memref<1x8xf32, #tpu.memory_space<vmem>>, %arg8: memref<16x8xf32, #tpu.memory_space<vmem>>) attributes {dimension_semantics = [#tpu.dimension_semantics<parallel>], iteration_bounds = array<i64: 1>, scalar_prefetch = 0 : i64, scratch_operands = 0 : i64, tpu.core_type = #tpu.core_type<tc>, window_params = [{transform_indices = @transform_0, window_bounds = array<i64: 16, 32>}, {pipeline_mode = #tpu.pipeline_mode<synchronous>, transform_indices = @transform_1, window_bounds = array<i64: 32, 128>}, {pipeline_mode = #tpu.pipeline_mode<synchronous>, transform_indices = @transform_2, window_bounds = array<i64: 1, 128>}, {pipeline_mode = #tpu.pipeline_mode<synchronous>, transform_indices = @transform_3, window_bounds = array<i64: 128, 128>}, {pipeline_mode = #tpu.pipeline_mode<synchronous>, transform_indices = @transform_4, window_bounds = array<i64: 1, 128>}, {pipeline_mode = #tpu.pipeline_mode<synchronous>, transform_indices = @transform_5, window_bounds = array<i64: 128, 8>}, {pipeline_mode = #tpu.pipeline_mode<synchronous>, transform_indices = @transform_6, window_bounds = array<i64: 1, 8>}, {transform_indices = @transform_7, window_bounds = array<i64: 16, 8>}]} {
    %c0 = arith.constant 0 : index
    %c0_0 = arith.constant 0 : index
    %0 = vector.load %arg1[%c0, %c0_0] : memref<16x32xf32, #tpu.memory_space<vmem>>, vector<16x32xf32>
    %c0_1 = arith.constant 0 : index
    %c0_2 = arith.constant 0 : index
    %1 = vector.load %arg2[%c0_1, %c0_2] : memref<32x128xf32, #tpu.memory_space<vmem>>, vector<32x128xf32>
    %cst = arith.constant dense<0.000000e+00> : vector<16x128xf32>
    %2 = tpu.matmul %0, %1, %cst {dimension_numbers = #tpu.dot_dimension_numbers<[1], [0], [0], [1], [0, 0, 1, 1], [], []>} : vector<16x32xf32>, vector<32x128xf32>, vector<16x128xf32> -> vector<16x128xf32>
    %c0_3 = arith.constant 0 : index
    %c0_4 = arith.constant 0 : index
    %3 = vector.load %arg3[%c0_3, %c0_4] : memref<1x128xf32, #tpu.memory_space<vmem>>, vector<1x128xf32>
    %4 = vector.broadcast %3 : vector<1x128xf32> to vector<16x128xf32>
    %5 = arith.addf %2, %4 : vector<16x128xf32>
    %6 = math.tanh %5 : vector<16x128xf32>
    %c0_5 = arith.constant 0 : index
    %c0_6 = arith.constant 0 : index
    %7 = vector.load %arg4[%c0_5, %c0_6] : memref<128x128xf32, #tpu.memory_space<vmem>>, vector<128x128xf32>
    %cst_7 = arith.constant dense<0.000000e+00> : vector<16x128xf32>
    %8 = tpu.matmul %6, %7, %cst_7 {dimension_numbers = #tpu.dot_dimension_numbers<[1], [0], [0], [1], [0, 0, 1, 1], [], []>} : vector<16x128xf32>, vector<128x128xf32>, vector<16x128xf32> -> vector<16x128xf32>
    %c0_8 = arith.constant 0 : index
    %c0_9 = arith.constant 0 : index
    %9 = vector.load %arg5[%c0_8, %c0_9] : memref<1x128xf32, #tpu.memory_space<vmem>>, vector<1x128xf32>
    %10 = vector.broadcast %9 : vector<1x128xf32> to vector<16x128xf32>
    %11 = arith.addf %8, %10 : vector<16x128xf32>
    %12 = math.tanh %11 : vector<16x128xf32>
    %c0_10 = arith.constant 0 : index
    %c0_11 = arith.constant 0 : index
    %13 = vector.load %arg6[%c0_10, %c0_11] : memref<128x8xf32, #tpu.memory_space<vmem>>, vector<128x8xf32>
    %cst_12 = arith.constant dense<0.000000e+00> : vector<16x8xf32>
    %14 = tpu.matmul %12, %13, %cst_12 {dimension_numbers = #tpu.dot_dimension_numbers<[1], [0], [0], [1], [0, 0, 1, 1], [], []>} : vector<16x128xf32>, vector<128x8xf32>, vector<16x8xf32> -> vector<16x8xf32>
    %c0_13 = arith.constant 0 : index
    %c0_14 = arith.constant 0 : index
    %15 = vector.load %arg7[%c0_13, %c0_14] : memref<1x8xf32, #tpu.memory_space<vmem>>, vector<1x8xf32>
    %16 = vector.broadcast %15 : vector<1x8xf32> to vector<16x8xf32>
    %17 = arith.addf %14, %16 : vector<16x8xf32>
    %18 = math.tanh %17 : vector<16x8xf32>
    %c0_15 = arith.constant 0 : index
    %c0_16 = arith.constant 0 : index
    %19 = vector.load %arg8[%c0_15, %c0_16] : memref<16x8xf32, #tpu.memory_space<vmem>>, vector<16x8xf32>
    tpu.vector_store %arg8[%c0_15, %c0_16], %18 {strides = array<i32>} : memref<16x8xf32, #tpu.memory_space<vmem>>, vector<16x8xf32>,
    return
  }
  func.func @transform_0(%arg0: i32) -> (i32, i32) {
    %c0_i32 = arith.constant 0 : i32
    %c0_i32_0 = arith.constant 0 : i32
    return %arg0, %c0_i32 : i32, i32
  }
  func.func @transform_1(%arg0: i32) -> (i32, i32) {
    %c0_i32 = arith.constant 0 : i32
    %c0_i32_0 = arith.constant 0 : i32
    %c0_i32_1 = arith.constant 0 : i32
    return %c0_i32, %c0_i32_0 : i32, i32
  }
  func.func @transform_2(%arg0: i32) -> (i32, i32) {
    %c0_i32 = arith.constant 0 : i32
    %c0_i32_0 = arith.constant 0 : i32
    %c0_i32_1 = arith.constant 0 : i32
    return %c0_i32, %c0_i32_0 : i32, i32
  }
  func.func @transform_3(%arg0: i32) -> (i32, i32) {
    %c0_i32 = arith.constant 0 : i32
    %c0_i32_0 = arith.constant 0 : i32
    %c0_i32_1 = arith.constant 0 : i32
    return %c0_i32, %c0_i32_0 : i32, i32
  }
  func.func @transform_4(%arg0: i32) -> (i32, i32) {
    %c0_i32 = arith.constant 0 : i32
    %c0_i32_0 = arith.constant 0 : i32
    %c0_i32_1 = arith.constant 0 : i32
    return %c0_i32, %c0_i32_0 : i32, i32
  }
  func.func @transform_5(%arg0: i32) -> (i32, i32) {
    %c0_i32 = arith.constant 0 : i32
    %c0_i32_0 = arith.constant 0 : i32
    %c0_i32_1 = arith.constant 0 : i32
    return %c0_i32, %c0_i32_0 : i32, i32
  }
  func.func @transform_6(%arg0: i32) -> (i32, i32) {
    %c0_i32 = arith.constant 0 : i32
    %c0_i32_0 = arith.constant 0 : i32
    %c0_i32_1 = arith.constant 0 : i32
    return %c0_i32, %c0_i32_0 : i32, i32
  }
  func.func @transform_7(%arg0: i32) -> (i32, i32) {
    %c0_i32 = arith.constant 0 : i32
    %c0_i32_0 = arith.constant 0 : i32
    return %arg0, %c0_i32 : i32, i32
  }
}

</mosaic_0001>

<llo_original>
// kernel: tpu_custom_call.1
$region0: #{tpu_custom_call.1}
  #allocation0 [shape = 'u32[]', space=smem, size = 0x4, offset = 0x4, fixed_abs, tag = 'smem constant byte address 0x4 - core index']
  #allocation1 [shape = 'u32[144,128]{1,0:T(1,128)}', space=vmem, size = 0x12000, scoped, tag = 'internal scratch']
  %s0 = inlined_call_operand.vmem [shape: f32[16,32], index: 0, kind: input, shape index: {}]
  %s1 = inlined_call_operand.hbm [shape: f32[32,128], index: 1, kind: input, shape index: {}]
  %s2 = inlined_call_operand.vmem [shape: f32[1,128], index: 2, kind: input, shape index: {}]
  %s3 = inlined_call_operand.vmem [shape: f32[128,128], index: 3, kind: input, shape index: {}]
  %s4 = inlined_call_operand.vmem [shape: f32[1,128], index: 4, kind: input, shape index: {}]
  %s5 = inlined_call_operand.vmem [shape: f32[128,8], index: 5, kind: input, shape index: {}]
  %s6 = inlined_call_operand.vmem [shape: f32[1,8], index: 6, kind: input, shape index: {}]
  %s7 = inlined_call_operand.vmem [shape: f32[16,8], index: 7, kind: output, shape index: {}]
  %s8 = sld [smem:[#allocation0]]
  $region42: #{tpu_custom_call.1} parent=0
    _
  %s10 = ssub.s32 1, %s8
  %s11 = scalar_select 0, %s10, %s8
  $region1: #{tpu_custom_call.1} parent=0
    #allocation2 [shape = 'u8[16384]{0}', space=vmem, size = 0x4000, scoped, tag = 'input window, operand 1, single buffered']
    #allocation3 [shape = 's32[1]{0}', space=sflag, size = 0x4, scoped, tag = 'scoped memory for tpu_custom_call.1']
    %12 = vsyncpa [#allocation3], 0
    // Predicated region
    $region2: #{tpu_custom_call.1} parent=1 // pred_check
      _
    $region3: #{tpu_custom_call.1} parent=1 // pred_check_branch
      %14 = sbr.rel (0) target = $region5
    $region4: #{tpu_custom_call.1} parent=1 // pred_region
      _
    $region5: #{tpu_custom_call.1} parent=1 // pred_fallthru
      _
    // Predicated region
    $region6: #{tpu_custom_call.1} parent=1 // pred_check
      _
    $region7: #{tpu_custom_call.1} parent=1 // pred_check_branch
      %16 = sbr.rel (0) target = $region9
    $region8: #{tpu_custom_call.1} parent=1 // pred_region
      %s18 = ssub.s32 512, 512
      %19 = vsyncadd [#allocation3], %s18
      %s20 = sshll.u32 [#allocation2], 4
      %s21 = int_to_ptr.vmem [resolvable:$true] %s20
      %26 = dma.hbm_to_vmem [thread:$0]  %s1, 512, %s21, [#allocation3], 128, 128, 8
    $region9: #{tpu_custom_call.1} parent=1 // pred_fallthru
      _
    // Predicated region
    $region10: #{tpu_custom_call.1} parent=1 // pred_check
      _
    $region11: #{tpu_custom_call.1} parent=1 // pred_check_branch
      %28 = sbr.rel (0) target = $region13
    $region12: #{tpu_custom_call.1} parent=1 // pred_region
      _
    $region13: #{tpu_custom_call.1} parent=1 // pred_fallthru
      _
    // Predicated region
    $region14: #{tpu_custom_call.1} parent=1 // pred_check
      _
    $region15: #{tpu_custom_call.1} parent=1 // pred_check_branch
      %30 = sbr.rel (0) target = $region17
    $region16: #{tpu_custom_call.1} parent=1 // pred_region
      _
    $region17: #{tpu_custom_call.1} parent=1 // pred_fallthru
      _
    // Predicated region
    $region18: #{tpu_custom_call.1} parent=1 // pred_check
      _
    $region19: #{tpu_custom_call.1} parent=1 // pred_check_branch
      %32 = sbr.rel (0) target = $region21
    $region20: #{tpu_custom_call.1} parent=1 // pred_region
      _
    $region21: #{tpu_custom_call.1} parent=1 // pred_fallthru
      _
    // Predicated region
    $region22: #{tpu_custom_call.1} parent=1 // pred_check
      _
    $region23: #{tpu_custom_call.1} parent=1 // pred_check_branch
      %34 = sbr.rel (0) target = $region25
    $region24: #{tpu_custom_call.1} parent=1 // pred_region
      _
    $region25: #{tpu_custom_call.1} parent=1 // pred_fallthru
      _
    // Predicated region
    $region26: #{tpu_custom_call.1} parent=1 // pred_check
      _
    $region27: #{tpu_custom_call.1} parent=1 // pred_check_branch
      %36 = sbr.rel (0) target = $region29
    $region28: #{tpu_custom_call.1} parent=1 // pred_region
      _
    $region29: #{tpu_custom_call.1} parent=1 // pred_fallthru
      _
    // Predicated region
    $region30: #{tpu_custom_call.1} parent=1 // pred_check
      _
    $region31: #{tpu_custom_call.1} parent=1 // pred_check_branch
      %38 = sbr.rel (0) target = $region33
    $region32: #{tpu_custom_call.1} parent=1 // pred_region
      %39 = dma.done [#allocation3], 512
    $region33: #{tpu_custom_call.1} parent=1 // pred_fallthru
      _
    %v40 = vld [vmem:[%s0] sm:$0xff]
    %v41 = vld [vmem:[%s0 + $0x8] sm:$0xff]
    %v42 = vld [vmem:[#allocation2] sm:$0xff]
    %v43 = vld [vmem:[#allocation2 + $0x8] sm:$0xff]
    %v44 = vld [vmem:[#allocation2 + $0x10] sm:$0xff]
    %v45 = vld [vmem:[#allocation2 + $0x18] sm:$0xff]
    %v46 = vld [vmem:[%s2] sm:$0x1]
    %v48 = vlaneseq
    %v49 = vshrl.u32 %v48, 7
    %v50 = vsub.s32 0, %v49
    %v51 = vrot.slane %v46, %v50
    %vm53 = vcmask 261120
    %v55 = vsel %vm53, %v40, 0
    %v58 = vsel %vm53, %v41, 0
    %60 = vmatprep.subr.mxu0 0.0
    %61 = vmatpush1.msra.mxu0 %v42
    %62 = vmatprep.subr.mxu0 0.0
    %63 = vmatpush1.msra.mxu0 %v43
    %64 = vmatprep.subr.mxu0 0.0
    %65 = vmatpush1.msra.mxu0 %v44
    %66 = vmatprep.subr.mxu0 0.0
    %67 = vmatpush1.msra.mxu0 %v45
    %68 = vmatprep.subr.mxu0 0.0
    %69 = vmatpush1.msra.mxu0 0.0
    %70 = vmatprep.subr.mxu0 0.0
    %71 = vmatpush1.msra.mxu0 0.0
    %72 = vmatprep.subr.mxu0 0.0
    %73 = vmatpush1.msra.mxu0 0.0
    %74 = vmatprep.subr.mxu0 0.0
    %75 = vmatpush1.msra.mxu0 0.0
    %76 = vmatprep.subr.mxu0 0.0
    %77 = vmatpush1.msra.mxu0 0.0
    %78 = vmatprep.subr.mxu0 0.0
    %79 = vmatpush1.msra.mxu0 0.0
    %80 = vmatprep.subr.mxu0 0.0
    %81 = vmatpush1.msra.mxu0 0.0
    %82 = vmatprep.subr.mxu0 0.0
    %83 = vmatpush1.msra.mxu0 0.0
    %84 = vmatprep.subr.mxu0 0.0
    %85 = vmatpush1.msra.mxu0 0.0
    %86 = vmatprep.subr.mxu0 0.0
    %87 = vmatpush1.msra.mxu0 0.0
    %88 = vmatprep.subr.mxu0 0.0
    %89 = vmatpush1.msra.mxu0 0.0
    %90 = vmatprep.subr.mxu0 0.0
    %91 = vmatpush1.msra.mxu0 0.0
    %92 = vmatprep.subr.mxu0 0.0
    %93 = vmatpush1.msra.mxu0 0.0
    %94 = vmatprep.subr.mxu0 0.0
    %95 = vmatpush1.msra.mxu0 0.0
    %96 = vmatprep.subr.mxu0 0.0
    %97 = vmatpush1.msra.mxu0 0.0
    %98 = vmatprep.subr.mxu0 0.0
    %99 = vmatpush1.msra.mxu0 0.0
    %100 = vmatprep.subr.mxu0 0.0
    %101 = vmatpush1.msra.mxu0 0.0
    %102 = vmatprep.subr.mxu0 0.0
    %103 = vmatpush1.msra.mxu0 0.0
    %104 = vmatprep.subr.mxu0 0.0
    %105 = vmatpush1.msra.mxu0 0.0
    %106 = vmatprep.subr.mxu0 0.0
    %107 = vmatpush1.msra.mxu0 0.0
    %108 = vmatprep.subr.mxu0 0.0
    %109 = vmatpush1.msra.mxu0 0.0
    %110 = vmatprep.subr.mxu0 0.0
    %111 = vmatpush1.msra.mxu0 0.0
    %112 = vmatprep.subr.mxu0 0.0
    %113 = vmatpush1.msra.mxu0 0.0
    %114 = vmatprep.subr.mxu0 0.0
    %115 = vmatpush1.msra.mxu0 0.0
    %116 = vmatprep.subr.mxu0 0.0
    %117 = vmatpush1.msra.mxu0 0.0
    %118 = vmatprep.subr.mxu0 0.0
    %119 = vmatpush1.msra.mxu0 0.0
    %120 = vmatprep.subr.mxu0 0.0
    %121 = vmatpush1.msra.mxu0 0.0
    %122 = vmatprep.subr.mxu0 0.0
    %123 = vmatpush1.msra.mxu0 0.0
    %124 = vmatprep.mubr.f32.mxu0 0.0
    %125 = vmatmul.mubr.f32.gmra.mrb[0].mxu0 %v55
    %v126 = vpop.f32.mrb[0].mxu0
    %v127 = vadd.f32 %v51, %v126
    %v128 = vpop.f32.mrb[0].mxu0
    %129 = vmatprep.mubr.f32.mxu0 0.0
    %130 = vmatmul.mubr.f32.gmra.mrb[0].mxu0 %v58
    %v131 = vpop.f32.mrb[0].mxu0
    %v132 = vadd.f32 %v51, %v131
    %v133 = vpop.f32.mrb[0].mxu0
    %134 = vdwg.mxu0
    %v135 = vtanh.pop %v127
    %v136 = vtanh.pop %v132
    %v137 = vld [vmem:[%s3] sm:$0xff]
    %v138 = vld [vmem:[%s3 + $0x8] sm:$0xff]
    %v139 = vld [vmem:[%s3 + $0x10] sm:$0xff]
    %v140 = vld [vmem:[%s3 + $0x18] sm:$0xff]
    %v141 = vld [vmem:[%s3 + $0x20] sm:$0xff]
    %v142 = vld [vmem:[%s3 + $0x28] sm:$0xff]
    %v143 = vld [vmem:[%s3 + $0x30] sm:$0xff]
    %v144 = vld [vmem:[%s3 + $0x38] sm:$0xff]
    %v145 = vld [vmem:[%s3 + $0x40] sm:$0xff]
    %v146 = vld [vmem:[%s3 + $0x48] sm:$0xff]
    %v147 = vld [vmem:[%s3 + $0x50] sm:$0xff]
    %v148 = vld [vmem:[%s3 + $0x58] sm:$0xff]
    %v149 = vld [vmem:[%s3 + $0x60] sm:$0xff]
    %v150 = vld [vmem:[%s3 + $0x68] sm:$0xff]
    %v151 = vld [vmem:[%s3 + $0x70] sm:$0xff]
    %v152 = vld [vmem:[%s3 + $0x78] sm:$0xff]
    %v153 = vld [vmem:[%s4] sm:$0x1]
    %v155 = vlaneseq
    %v156 = vshrl.u32 %v155, 7
    %v157 = vsub.s32 0, %v156
    %v158 = vrot.slane %v153, %v157
    %160 = vmatprep.subr.mxu0 0.0
    %161 = vmatpush1.msra.mxu0 %v137
    %162 = vmatprep.subr.mxu0 0.0
    %163 = vmatpush1.msra.mxu0 %v138
    %164 = vmatprep.subr.mxu0 0.0
    %165 = vmatpush1.msra.mxu0 %v139
    %166 = vmatprep.subr.mxu0 0.0
    %167 = vmatpush1.msra.mxu0 %v140
    %168 = vmatprep.subr.mxu0 0.0
    %169 = vmatpush1.msra.mxu0 %v141
    %170 = vmatprep.subr.mxu0 0.0
    %171 = vmatpush1.msra.mxu0 %v142
    %172 = vmatprep.subr.mxu0 0.0
    %173 = vmatpush1.msra.mxu0 %v143
    %174 = vmatprep.subr.mxu0 0.0
    %175 = vmatpush1.msra.mxu0 %v144
    %176 = vmatprep.subr.mxu0 0.0
    %177 = vmatpush1.msra.mxu0 %v145
    %178 = vmatprep.subr.mxu0 0.0
    %179 = vmatpush1.msra.mxu0 %v146
    %180 = vmatprep.subr.mxu0 0.0
    %181 = vmatpush1.msra.mxu0 %v147
    %182 = vmatprep.subr.mxu0 0.0
    %183 = vmatpush1.msra.mxu0 %v148
    %184 = vmatprep.subr.mxu0 0.0
    %185 = vmatpush1.msra.mxu0 %v149
    %186 = vmatprep.subr.mxu0 0.0
    %187 = vmatpush1.msra.mxu0 %v150
    %188 = vmatprep.subr.mxu0 0.0
    %189 = vmatpush1.msra.mxu0 %v151
    %190 = vmatprep.subr.mxu0 0.0
    %191 = vmatpush1.msra.mxu0 %v152
    %192 = vmatprep.subr.mxu0 0.0
    %193 = vmatpush1.msra.mxu0 0.0
    %194 = vmatprep.subr.mxu0 0.0
    %195 = vmatpush1.msra.mxu0 0.0
    %196 = vmatprep.subr.mxu0 0.0
    %197 = vmatpush1.msra.mxu0 0.0
    %198 = vmatprep.subr.mxu0 0.0
    %199 = vmatpush1.msra.mxu0 0.0
    %200 = vmatprep.subr.mxu0 0.0
    %201 = vmatpush1.msra.mxu0 0.0
    %202 = vmatprep.subr.mxu0 0.0
    %203 = vmatpush1.msra.mxu0 0.0
    %204 = vmatprep.subr.mxu0 0.0
    %205 = vmatpush1.msra.mxu0 0.0
    %206 = vmatprep.subr.mxu0 0.0
    %207 = vmatpush1.msra.mxu0 0.0
    %208 = vmatprep.subr.mxu0 0.0
    %209 = vmatpush1.msra.mxu0 0.0
    %210 = vmatprep.subr.mxu0 0.0
    %211 = vmatpush1.msra.mxu0 0.0
    %212 = vmatprep.subr.mxu0 0.0
    %213 = vmatpush1.msra.mxu0 0.0
    %214 = vmatprep.subr.mxu0 0.0
    %215 = vmatpush1.msra.mxu0 0.0
    %216 = vmatprep.subr.mxu0 0.0
    %217 = vmatpush1.msra.mxu0 0.0
    %218 = vmatprep.subr.mxu0 0.0
    %219 = vmatpush1.msra.mxu0 0.0
    %220 = vmatprep.subr.mxu0 0.0
    %221 = vmatpush1.msra.mxu0 0.0
    %222 = vmatprep.subr.mxu0 0.0
    %223 = vmatpush1.msra.mxu0 0.0
    %224 = vmatprep.mubr.f32.mxu0 0.0
    %225 = vmatmul.mubr.f32.gmra.mrb[0].mxu0 %v135
    %v226 = vpop.f32.mrb[0].mxu0
    %v227 = vadd.f32 %v158, %v226
    %v228 = vpop.f32.mrb[0].mxu0
    %229 = vmatprep.mubr.f32.mxu0 0.0
    %230 = vmatmul.mubr.f32.gmra.mrb[0].mxu0 %v136
    %v231 = vpop.f32.mrb[0].mxu0
    %v232 = vadd.f32 %v158, %v231
    %v233 = vpop.f32.mrb[0].mxu0
    %234 = vdwg.mxu0
    %v235 = vtanh.pop %v227
    %v236 = vtanh.pop %v232
    %v237 = vld [vmem:[%s5] sm:$0xff]
    %v238 = vld [vmem:[%s5 + $0x8] sm:$0xff]
    %v239 = vld [vmem:[%s5 + $0x10] sm:$0xff]
    %v240 = vld [vmem:[%s5 + $0x18] sm:$0xff]
    %v241 = vld [vmem:[%s5 + $0x20] sm:$0xff]
    %v242 = vld [vmem:[%s5 + $0x28] sm:$0xff]
    %v243 = vld [vmem:[%s5 + $0x30] sm:$0xff]
    %v244 = vld [vmem:[%s5 + $0x38] sm:$0xff]
    %v245 = vld [vmem:[%s5 + $0x40] sm:$0xff]
    %v246 = vld [vmem:[%s5 + $0x48] sm:$0xff]
    %v247 = vld [vmem:[%s5 + $0x50] sm:$0xff]
    %v248 = vld [vmem:[%s5 + $0x58] sm:$0xff]
    %v249 = vld [vmem:[%s5 + $0x60] sm:$0xff]
    %v250 = vld [vmem:[%s5 + $0x68] sm:$0xff]
    %v251 = vld [vmem:[%s5 + $0x70] sm:$0xff]
    %v252 = vld [vmem:[%s5 + $0x78] sm:$0xff]
    %v253 = vld [vmem:[%s6] sm:$0x1]
    %v255 = vlaneseq
    %v256 = vshrl.u32 %v255, 7
    %v257 = vsub.s32 0, %v256
    %v258 = vrot.slane %v253, %v257
    %260 = vmatprep.subr.mxu0 0.0
    %261 = vmatpush1.msra.mxu0 %v237
    %262 = vmatprep.subr.mxu0 0.0
    %263 = vmatpush1.msra.mxu0 %v238
    %264 = vmatprep.subr.mxu0 0.0
    %265 = vmatpush1.msra.mxu0 %v239
    %266 = vmatprep.subr.mxu0 0.0
    %267 = vmatpush1.msra.mxu0 %v240
    %268 = vmatprep.subr.mxu0 0.0
    %269 = vmatpush1.msra.mxu0 %v241
    %270 = vmatprep.subr.mxu0 0.0
    %271 = vmatpush1.msra.mxu0 %v242
    %272 = vmatprep.subr.mxu0 0.0
    %273 = vmatpush1.msra.mxu0 %v243
    %274 = vmatprep.subr.mxu0 0.0
    %275 = vmatpush1.msra.mxu0 %v244
    %276 = vmatprep.subr.mxu0 0.0
    %277 = vmatpush1.msra.mxu0 %v245
    %278 = vmatprep.subr.mxu0 0.0
    %279 = vmatpush1.msra.mxu0 %v246
    %280 = vmatprep.subr.mxu0 0.0
    %281 = vmatpush1.msra.mxu0 %v247
    %282 = vmatprep.subr.mxu0 0.0
    %283 = vmatpush1.msra.mxu0 %v248
    %284 = vmatprep.subr.mxu0 0.0
    %285 = vmatpush1.msra.mxu0 %v249
    %286 = vmatprep.subr.mxu0 0.0
    %287 = vmatpush1.msra.mxu0 %v250
    %288 = vmatprep.subr.mxu0 0.0
    %289 = vmatpush1.msra.mxu0 %v251
    %290 = vmatprep.subr.mxu0 0.0
    %291 = vmatpush1.msra.mxu0 %v252
    %292 = vmatprep.subr.mxu0 0.0
    %293 = vmatpush1.msra.mxu0 0.0
    %294 = vmatprep.subr.mxu0 0.0
    %295 = vmatpush1.msra.mxu0 0.0
    %296 = vmatprep.subr.mxu0 0.0
    %297 = vmatpush1.msra.mxu0 0.0
    %298 = vmatprep.subr.mxu0 0.0
    %299 = vmatpush1.msra.mxu0 0.0
    %300 = vmatprep.subr.mxu0 0.0
    %301 = vmatpush1.msra.mxu0 0.0
    %302 = vmatprep.subr.mxu0 0.0
    %303 = vmatpush1.msra.mxu0 0.0
    %304 = vmatprep.subr.mxu0 0.0
    %305 = vmatpush1.msra.mxu0 0.0
    %306 = vmatprep.subr.mxu0 0.0
    %307 = vmatpush1.msra.mxu0 0.0
    %308 = vmatprep.subr.mxu0 0.0
    %309 = vmatpush1.msra.mxu0 0.0
    %310 = vmatprep.subr.mxu0 0.0
    %311 = vmatpush1.msra.mxu0 0.0
    %312 = vmatprep.subr.mxu0 0.0
    %313 = vmatpush1.msra.mxu0 0.0
    %314 = vmatprep.subr.mxu0 0.0
    %315 = vmatpush1.msra.mxu0 0.0
    %316 = vmatprep.subr.mxu0 0.0
    %317 = vmatpush1.msra.mxu0 0.0
    %318 = vmatprep.subr.mxu0 0.0
    %319 = vmatpush1.msra.mxu0 0.0
    %320 = vmatprep.subr.mxu0 0.0
    %321 = vmatpush1.msra.mxu0 0.0
    %322 = vmatprep.subr.mxu0 0.0
    %323 = vmatpush1.msra.mxu0 0.0
    %324 = vmatprep.mubr.f32.mxu0 0.0
    %325 = vmatmul.mubr.f32.gmra.mrb[0].mxu0 %v235
    %v326 = vpop.f32.mrb[0].mxu0
    %v327 = vadd.f32 %v258, %v326
    %v328 = vpop.f32.mrb[0].mxu0
    %329 = vmatprep.mubr.f32.mxu0 0.0
    %330 = vmatmul.mubr.f32.gmra.mrb[0].mxu0 %v236
    %v331 = vpop.f32.mrb[0].mxu0
    %v332 = vadd.f32 %v258, %v331
    %v333 = vpop.f32.mrb[0].mxu0
    %334 = vdwg.mxu0
    %v335 = vtanh.pop %v327
    %v336 = vtanh.pop %v332
    %vm337 = vcmask 64512
    %338 = vst.msk [vmem:[%s7] sm:$0xff] %vm337, %v335
    %339 = vst.msk [vmem:[%s7 + $0x8] sm:$0xff] %vm337, %v336
    // Predicated region
    $region34: #{tpu_custom_call.1} parent=1 // pred_check
      _
    $region35: #{tpu_custom_call.1} parent=1 // pred_check_branch
      %341 = sbr.rel (0) target = $region37
    $region36: #{tpu_custom_call.1} parent=1 // pred_region
      _
    $region37: #{tpu_custom_call.1} parent=1 // pred_fallthru
      _
    // Predicated region
    $region38: #{tpu_custom_call.1} parent=1 // pred_check
      _
    $region39: #{tpu_custom_call.1} parent=1 // pred_check_branch
      %343 = sbr.rel (0) target = $region41
    $region40: #{tpu_custom_call.1} parent=1 // pred_region
      _
    $region41: #{tpu_custom_call.1} parent=1 // pred_fallthru
      _
    %344 = vsyncpa [#allocation3], 1

</llo_original>
